<compile_context>
chip_gen: v7x
topology: tpu7x:2x2x1
jax: 0.10.0
libtpu: 0.0.40
codegen_flags: <defaults>
</compile_context>

<pallas_src>
import functools

import jax
import jax.numpy as jnp
from jax.experimental import pallas as pl
from jax.experimental.pallas import tpu as pltpu


# ----------------------------- Pallas kernel ------------------------------- #

def _linear_kernel(x_ref, w_ref, b_ref, o_ref):
    # One (tm, tn) output tile: (tm, K) @ (K, tn) + (1, tn); f32 MXU accumulation,
    # stored directly as float32 (o_ref is f32).
    acc = jnp.dot(x_ref[...], w_ref[...], preferred_element_type=jnp.float32)
    o_ref[...] = acc + b_ref[...].astype(jnp.float32)


def _sublane(dtype):
    # min sublane granularity per itemsize: f32 -> 8, bf16 -> 16, int8/fp8 -> 32
    return {4: 8, 2: 16, 1: 32}.get(jnp.dtype(dtype).itemsize, 8)


def linear_pallas(x2d, w, b, *, tm_max=256, tn_max=512):
    """y = x2d @ w + b, returned as float32 with lane padding kept.

    x2d: (M, K), w: (K, N), b: (N,)  ->  (M, N_pad) float32, N_pad = ceil(N/128)*128.

    The lane axis is zero-padded to a 128 multiple (unmasked lane-dense vst); the
    caller consumes only the first N columns (slice fuses into the fold reshape).
    K stays fully resident per tile (fine for FGT hidden sizes; tile K with a
    pl.when-guarded accumulator if hidden ever outgrows the VMEM budget below).
    """
    M, K = x2d.shape
    K2, N = w.shape
    assert K == K2

    g = _sublane(x2d.dtype)

    # lane axis (N): 128 granularity, as few tiles as possible (cap tn at tn_max)
    N_pad = pl.cdiv(N, 128) * 128
    if N_pad <= tn_max:
        tn = N_pad
    else:
        tn = 128
        for cand in range(tn_max - tn_max % 128, 127, -128):
            if N_pad % cand == 0:
                tn = cand
                break

    # row axis (M): dtype-aware sublane granularity; prefer a divisor of M so the
    # activation needs no padding (and the output no row slicing).
    tm = 0
    if M % g == 0:
        for cand in range(min(tm_max, M), g - 1, -g):
            if M % cand == 0:
                tm = cand
                break
        if tm < min(64, M):          # pathological divisor structure: padding is cheaper
            tm = 0
    if tm == 0:
        m_round = pl.cdiv(M, g) * g
        tm = max(g, (min(tm_max, m_round) // g) * g)
    M_pad = pl.cdiv(M, tm) * tm

    if M_pad != M:
        x2d = jnp.pad(x2d, ((0, M_pad - M), (0, 0)))
    if N_pad != N:
        w = jnp.pad(w, ((0, 0), (0, N_pad - N)))
        b = jnp.pad(b, (0, N_pad - N))
    b2d = b.reshape(1, N_pad)

    nt_n = N_pad // tn
    nt_m = M_pad // tm

    in_item = jnp.dtype(x2d.dtype).itemsize
    cost = pl.CostEstimate(
        flops=2 * M_pad * K * N_pad,
        transcendentals=0,
        bytes_accessed=(M_pad * K + K * N_pad + N_pad) * in_item + M_pad * N_pad * 4,
    )
    # double-buffered VMEM footprint (+ headroom); v7x only has 64 MiB physical VMEM.
    vmem_need = 2 * ((tm * K + K * tn + tn) * in_item + tm * tn * 4)
    vmem_limit = int(min(max(2 * vmem_need, 8 << 20), 64 << 20))

    if nt_n == 1:
        # single N tile: 1-D grid over row tiles, W / bias truly resident, x read once.
        grid = (nt_m,)
        in_specs = [
            pl.BlockSpec((tm, K), lambda i: (i, 0)),
            pl.BlockSpec((K, tn), lambda i: (0, 0)),
            pl.BlockSpec((1, tn), lambda i: (0, 0)),
        ]
        out_specs = pl.BlockSpec((tm, tn), lambda i: (i, 0))
        dims = ("parallel",)
    else:
        # N tiles OUTER so W / bias blocks stay VMEM-resident across the inner M loop.
        grid = (nt_n, nt_m)
        in_specs = [
            pl.BlockSpec((tm, K), lambda j, i: (i, 0)),
            pl.BlockSpec((K, tn), lambda j, i: (0, j)),
            pl.BlockSpec((1, tn), lambda j, i: (0, j)),
        ]
        out_specs = pl.BlockSpec((tm, tn), lambda j, i: (i, j))
        dims = ("parallel", "parallel")

    out = pl.pallas_call(
        _linear_kernel,
        out_shape=jax.ShapeDtypeStruct((M_pad, N_pad), jnp.float32),
        grid_spec=pltpu.PrefetchScalarGridSpec(
            num_scalar_prefetch=0,
            grid=grid,
            in_specs=in_specs,
            out_specs=out_specs,
        ),
        compiler_params=pltpu.CompilerParams(
            dimension_semantics=dims,
            vmem_limit_bytes=vmem_limit,
        ),
        cost_estimate=cost,
    )(x2d, w, b2d)

    if M_pad != M:
        out = out[:M]          # row padding only; lane padding is consumed downstream
    return out                  # (M, N_pad) float32


# ------------------------------ JAX glue (fold) ----------------------------- #
# TODO(synk): nn.Fold's overlapping scatter-add has no clean single-Pallas-kernel
# equivalent; it is expressed in XLA, restructured as contiguous residue-plane adds
# plus ONE interleaving transpose (no strided scatter-adds on the output).

def fold_col2im_tokens(cols, channel, output_size, kernel_size, stride, padding):
    """JAX equivalent of torch.nn.Fold, consuming TOKEN-MAJOR columns.

    cols: (B, L, N_pad) float32 — the Pallas linear output; only the first C*kh*kw
          columns are real (the lane padding is sliced inside the reshape so XLA
          fuses it). Channel decomposition [C, kh, kw] (C outermost), patches
          row-major over the (ph, pw) patch grid.
    returns: (B, C, H, W) NCHW, matching PyTorch's nn.Fold (f32 accumulation).
    """
    H, W = output_size
    kh, kw = kernel_size
    sh, sw = stride
    pad_h, pad_w = padding
    B, L, _ = cols.shape
    C = channel
    ph = (H + 2 * pad_h - kh) // sh + 1
    pw = (W + 2 * pad_w - kw) // sw + 1
    assert ph * pw == L

    cols6 = cols[..., :C * kh * kw].reshape(B, ph, pw, C, kh, kw)

    # Residue-lattice decomposition: padded-output pixel (y, x) only receives
    # contributions from kernel offsets (ki, kj) with ki ≡ y (mod sh), kj ≡ x (mod sw).
    # Each residue (di, dj) is accumulated independently on a small CONTIGUOUS plane
    # (dense rectangular window adds), then one 6-D transpose/reshape interleaves the
    # planes into the padded output.
    nq_h = -(-kh // sh)            # max kernel offsets per row residue
    nq_w = -(-kw // sw)
    he = ph + nq_h - 1
    we = pw + nq_w - 1

    planes = []
    for di in range(sh):
        for dj in range(sw):
            plane = jnp.zeros((B, he, we, C), cols.dtype)
            for qi, ki in enumerate(range(di, kh, sh)):
                for qj, kj in enumerate(range(dj, kw, sw)):
                    block = cols6[:, :, :, :, ki, kj]            # (B, ph, pw, C)
                    plane = plane.at[:, qi:qi + ph, qj:qj + pw, :].add(block)
            planes.append(plane)

    acc = jnp.stack(planes).reshape(sh, sw, B, he, we, C)
    # interleave: padded row = di + sh*q  <->  merged index q*sh + di (same for cols)
    full = jnp.transpose(acc, (2, 5, 3, 0, 4, 1)).reshape(B, C, he * sh, we * sw)
    return full[:, :, pad_h:pad_h + H, pad_w:pad_w + W]


def _fold_ref_nchw(cols_ncl, output_size, kernel_size, stride, padding):
    """Reference fold on the PyTorch-native (B, C*kh*kw, L) layout (checking only)."""
    H, W = output_size
    kh, kw = kernel_size
    sh, sw = stride
    pad_h, pad_w = padding
    B, ckk, L = cols_ncl.shape
    C = ckk // (kh * kw)
    ph = (H + 2 * pad_h - kh) // sh + 1
    pw = (W + 2 * pad_w - kw) // sw + 1
    cols6 = cols_ncl.reshape(B, C, kh, kw, ph, pw)
    out = jnp.zeros((B, C, H + 2 * pad_h, W + 2 * pad_w), cols_ncl.dtype)
    for ki in range(kh):
        for kj in range(kw):
            out = out.at[:, :, ki:ki + sh * ph:sh, kj:kj + sw * pw:sw].add(
                cols6[:, :, ki, kj, :, :])
    return out[:, :, pad_h:pad_h + H, pad_w:pad_w + W]


# ------------------------------ Vec2Patch module ---------------------------- #

class Vec2PatchPallas:
    def __init__(self, channel, hidden, output_size, kernel_size, stride, padding, key,
                 param_dtype=jnp.float32):
        # param_dtype=jnp.bfloat16 is recommended for production on v6e/v7x (halves
        # MXU input bytes); the kernel keeps f32 accumulation and emits f32.
        self.channel = channel
        self.hidden = hidden
        self.output_size = output_size
        self.kernel_size = kernel_size
        self.stride = stride
        self.padding = padding
        c_out = functools.reduce(lambda a, b: a * b, kernel_size) * channel
        self.c_out = c_out
        kw_key, kb_key = jax.random.split(key)
        bound = 1.0 / (hidden ** 0.5)      # nn.Linear-style synthetic init
        self.weight = jax.random.uniform(kw_key, (hidden, c_out), jnp.float32,
                                         minval=-bound, maxval=bound).astype(param_dtype)
        self.bias = jax.random.uniform(kb_key, (c_out,), jnp.float32,
                                       minval=-bound, maxval=bound).astype(param_dtype)
        # NOTE: the PyTorch module defines self.relu = LeakyReLU(0.2) but never uses
        # it in forward(), so it is intentionally omitted.

    def __call__(self, x, output_h=0, output_w=0):
        # x: (B, L, hidden)
        B, L, K = x.shape
        feat = linear_pallas(x.reshape(B * L, K).astype(self.weight.dtype),
                             self.weight, self.bias)          # (B*L, N_pad) float32
        feat = feat.reshape(B, L, feat.shape[-1])             # token-major, no transpose
        if output_h != 0 or output_w != 0:
            out_size = (output_h, output_w)
        else:
            out_size = self.output_size
        return fold_col2im_tokens(feat, self.channel, out_size, self.kernel_size,
                                  self.stride, self.padding)


# ---------------------------------- main ------------------------------------ #

if __name__ == "__main__":
    key = jax.random.PRNGKey(0)
    k_param, k_x = jax.random.split(key)

    # Small, forward-consistent shapes:
    #   channel=4, hidden=32, output_size=(16,16), kernel=(4,4), stride=(2,2), pad=(1,1)
    #   -> patch grid ph=pw=8, L=64, c_out=64, M=B*L=128
    B, hidden, channel = 2, 32, 4
    output_size, kernel_size, stride, padding = (16, 16), (4, 4), (2, 2), (1, 1)
    ph = (output_size[0] + 2 * padding[0] - kernel_size[0]) // stride[0] + 1
    pw = (output_size[1] + 2 * padding[1] - kernel_size[1]) // stride[1] + 1
    L = ph * pw

    module = Vec2PatchPallas(channel, hidden, output_size, kernel_size, stride, padding,
                             key=k_param)
    x = jax.random.normal(k_x, (B, L, hidden), jnp.float32)

    fwd = jax.jit(lambda inp: module(inp))
    out = jax.block_until_ready(fwd(x))

    # output is NCHW (B, channel, H, W), same as nn.Fold
    assert out.shape == (B, channel, output_size[0], output_size[1]), out.shape
    assert out.dtype == jnp.float32

    # cross-check vs plain-JAX matmul + the PyTorch-layout (channel-major) fold
    w_f32 = module.weight.astype(jnp.float32)
    b_f32 = module.bias.astype(jnp.float32)
    feat_ref = x.reshape(B * L, hidden) @ w_f32 + b_f32
    feat_ref = feat_ref.reshape(B, L, module.c_out).transpose(0, 2, 1)   # (B, c_out, L)
    ref = _fold_ref_nchw(feat_ref, output_size, kernel_size, stride, padding)
    err = float(jnp.max(jnp.abs(out - ref)))
    assert jnp.allclose(out, ref, atol=3e-2, rtol=1e-2), err

    # bf16 production path smoke test (dtype-aware (16,128) tiling, f32 kernel output)
    module_bf = Vec2PatchPallas(channel, hidden, output_size, kernel_size, stride,
                                padding, key=k_param, param_dtype=jnp.bfloat16)
    out_bf = jax.block_until_ready(jax.jit(lambda inp: module_bf(inp))(x))
    x_bf = x.astype(jnp.bfloat16).astype(jnp.float32)
    feat_bf = (x_bf.reshape(B * L, hidden) @ module_bf.weight.astype(jnp.float32)
               + module_bf.bias.astype(jnp.float32))
    feat_bf = feat_bf.reshape(B, L, module.c_out).transpose(0, 2, 1)
    ref_bf = _fold_ref_nchw(feat_bf, output_size, kernel_size, stride, padding)
    err_bf = float(jnp.max(jnp.abs(out_bf - ref_bf)))
    assert out_bf.dtype == jnp.float32
    assert jnp.allclose(out_bf, ref_bf, atol=1e-1, rtol=5e-2), err_bf

    print("KERNEL_OK")
</pallas_src>

<mosaic_0001>
module attributes {stable_mosaic.version = 11 : i64} {
  func.func @_linear_kernel(%arg0: i32, %arg1: memref<128x32xf32, #tpu.memory_space<vmem>>, %arg2: memref<32x128xf32, #tpu.memory_space<vmem>>, %arg3: memref<1x128xf32, #tpu.memory_space<vmem>>, %arg4: memref<128x128xf32, #tpu.memory_space<vmem>>) attributes {dimension_semantics = [#tpu.dimension_semantics<parallel>], iteration_bounds = array<i64: 1>, scalar_prefetch = 0 : i64, scratch_operands = 0 : i64, tpu.core_type = #tpu.core_type<tc>, window_params = [{transform_indices = @transform_0, window_bounds = array<i64: 128, 32>}, {pipeline_mode = #tpu.pipeline_mode<synchronous>, transform_indices = @transform_1, window_bounds = array<i64: 32, 128>}, {pipeline_mode = #tpu.pipeline_mode<synchronous>, transform_indices = @transform_2, window_bounds = array<i64: 1, 128>}, {transform_indices = @transform_3, window_bounds = array<i64: 128, 128>}]} {
    %c0 = arith.constant 0 : index
    %c0_0 = arith.constant 0 : index
    %0 = vector.load %arg1[%c0, %c0_0] : memref<128x32xf32, #tpu.memory_space<vmem>>, vector<128x32xf32>
    %c0_1 = arith.constant 0 : index
    %c0_2 = arith.constant 0 : index
    %1 = vector.load %arg2[%c0_1, %c0_2] : memref<32x128xf32, #tpu.memory_space<vmem>>, vector<32x128xf32>
    %cst = arith.constant dense<0.000000e+00> : vector<128x128xf32>
    %2 = tpu.matmul %0, %1, %cst {dimension_numbers = #tpu.dot_dimension_numbers<[1], [0], [0], [1], [0, 0, 1, 1], [], []>} : vector<128x32xf32>, vector<32x128xf32>, vector<128x128xf32> -> vector<128x128xf32>
    %c0_3 = arith.constant 0 : index
    %c0_4 = arith.constant 0 : index
    %3 = vector.load %arg3[%c0_3, %c0_4] : memref<1x128xf32, #tpu.memory_space<vmem>>, vector<1x128xf32>
    %4 = vector.broadcast %3 : vector<1x128xf32> to vector<128x128xf32>
    %5 = arith.addf %2, %4 : vector<128x128xf32>
    %c0_5 = arith.constant 0 : index
    %c0_6 = arith.constant 0 : index
    %6 = vector.load %arg4[%c0_5, %c0_6] : memref<128x128xf32, #tpu.memory_space<vmem>>, vector<128x128xf32>
    tpu.vector_store %arg4[%c0_5, %c0_6], %5 {strides = array<i32>} : memref<128x128xf32, #tpu.memory_space<vmem>>, vector<128x128xf32>,
    return
  }
  func.func @transform_0(%arg0: i32) -> (i32, i32) {
    %c0_i32 = arith.constant 0 : i32
    %c0_i32_0 = arith.constant 0 : i32
    return %arg0, %c0_i32 : i32, i32
  }
  func.func @transform_1(%arg0: i32) -> (i32, i32) {
    %c0_i32 = arith.constant 0 : i32
    %c0_i32_0 = arith.constant 0 : i32
    %c0_i32_1 = arith.constant 0 : i32
    return %c0_i32, %c0_i32_0 : i32, i32
  }
  func.func @transform_2(%arg0: i32) -> (i32, i32) {
    %c0_i32 = arith.constant 0 : i32
    %c0_i32_0 = arith.constant 0 : i32
    %c0_i32_1 = arith.constant 0 : i32
    return %c0_i32, %c0_i32_0 : i32, i32
  }
  func.func @transform_3(%arg0: i32) -> (i32, i32) {
    %c0_i32 = arith.constant 0 : i32
    %c0_i32_0 = arith.constant 0 : i32
    return %arg0, %c0_i32 : i32, i32
  }
}

</mosaic_0001>

<llo_original>
// kernel: _lambda_.1
$region0: #{_lambda_.1}
  #allocation0 [shape = 'u32[]', space=smem, size = 0x4, offset = 0x4, fixed_abs, tag = 'smem constant byte address 0x4 - core index']
  #allocation1 [shape = 'u32[144,128]{1,0:T(1,128)}', space=vmem, size = 0x12000, scoped, tag = 'internal scratch']
  %s0 = inlined_call_operand.vmem [shape: f32[128,32], index: 0, kind: input, shape index: {}]
  %s1 = inlined_call_operand.vmem [shape: f32[32,128], index: 1, kind: input, shape index: {}]
  %s2 = inlined_call_operand.vmem [shape: f32[1,128], index: 2, kind: input, shape index: {}]
  %s3 = inlined_call_operand.vmem [shape: f32[128,128], index: 3, kind: output, shape index: {}]
  %s4 = sld [smem:[#allocation0]]
  $region22: #{_lambda_.1} parent=0
    _
  %s6 = ssub.s32 1, %s4
  %s7 = scalar_select 0, %s6, %s4
  // Predicated region
  $region2: #{_lambda_.1} parent=0 // pred_check
    _
  $region3: #{_lambda_.1} parent=0 // pred_check_branch
    %9 = sbr.rel (0) target = $region5
  $region4: #{_lambda_.1} parent=0 // pred_region
    _
  $region5: #{_lambda_.1} parent=0 // pred_fallthru
    _
  // Predicated region
  $region6: #{_lambda_.1} parent=0 // pred_check
    _
  $region7: #{_lambda_.1} parent=0 // pred_check_branch
    %11 = sbr.rel (0) target = $region9
  $region8: #{_lambda_.1} parent=0 // pred_region
    _
  $region9: #{_lambda_.1} parent=0 // pred_fallthru
    _
  // Predicated region
  $region10: #{_lambda_.1} parent=0 // pred_check
    _
  $region11: #{_lambda_.1} parent=0 // pred_check_branch
    %13 = sbr.rel (0) target = $region13
  $region12: #{_lambda_.1} parent=0 // pred_region
    _
  $region13: #{_lambda_.1} parent=0 // pred_fallthru
    _
  %v14 = vld [vmem:[%s0] sm:$0xff]
  %v15 = vld [vmem:[%s0 + $0x8] sm:$0xff]
  %v16 = vld [vmem:[%s0 + $0x10] sm:$0xff]
  %v17 = vld [vmem:[%s0 + $0x18] sm:$0xff]
  %v18 = vld [vmem:[%s0 + $0x20] sm:$0xff]
  %v19 = vld [vmem:[%s0 + $0x28] sm:$0xff]
  %v20 = vld [vmem:[%s0 + $0x30] sm:$0xff]
  %v21 = vld [vmem:[%s0 + $0x38] sm:$0xff]
  %v22 = vld [vmem:[%s0 + $0x40] sm:$0xff]
  %v23 = vld [vmem:[%s0 + $0x48] sm:$0xff]
  %v24 = vld [vmem:[%s0 + $0x50] sm:$0xff]
  %v25 = vld [vmem:[%s0 + $0x58] sm:$0xff]
  %v26 = vld [vmem:[%s0 + $0x60] sm:$0xff]
  %v27 = vld [vmem:[%s0 + $0x68] sm:$0xff]
  %v28 = vld [vmem:[%s0 + $0x70] sm:$0xff]
  %v29 = vld [vmem:[%s0 + $0x78] sm:$0xff]
  %v30 = vld [vmem:[%s1] sm:$0xff]
  %v31 = vld [vmem:[%s1 + $0x8] sm:$0xff]
  %v32 = vld [vmem:[%s1 + $0x10] sm:$0xff]
  %v33 = vld [vmem:[%s1 + $0x18] sm:$0xff]
  %v34 = vld [vmem:[%s2] sm:$0x1]
  %v36 = vlaneseq
  %v37 = vshrl.u32 %v36, 7
  %v38 = vsub.s32 0, %v37
  %v39 = vrot.slane %v34, %v38
  %vm41 = vcmask 261120
  %v43 = vsel %vm41, %v14, 0
  %v46 = vsel %vm41, %v15, 0
  %v49 = vsel %vm41, %v16, 0
  %v52 = vsel %vm41, %v17, 0
  %v55 = vsel %vm41, %v18, 0
  %v58 = vsel %vm41, %v19, 0
  %v61 = vsel %vm41, %v20, 0
  %v64 = vsel %vm41, %v21, 0
  %v67 = vsel %vm41, %v22, 0
  %v70 = vsel %vm41, %v23, 0
  %v73 = vsel %vm41, %v24, 0
  %v76 = vsel %vm41, %v25, 0
  %v79 = vsel %vm41, %v26, 0
  %v82 = vsel %vm41, %v27, 0
  %v85 = vsel %vm41, %v28, 0
  %v88 = vsel %vm41, %v29, 0
  %90 = vmatprep.subr.mxu0 0.0
  %91 = vmatpush1.msra.mxu0 %v30
  %92 = vmatprep.subr.mxu0 0.0
  %93 = vmatpush1.msra.mxu0 %v31
  %94 = vmatprep.subr.mxu0 0.0
  %95 = vmatpush1.msra.mxu0 %v32
  %96 = vmatprep.subr.mxu0 0.0
  %97 = vmatpush1.msra.mxu0 %v33
  %98 = vmatprep.subr.mxu0 0.0
  %99 = vmatpush1.msra.mxu0 0.0
  %100 = vmatprep.subr.mxu0 0.0
  %101 = vmatpush1.msra.mxu0 0.0
  %102 = vmatprep.subr.mxu0 0.0
  %103 = vmatpush1.msra.mxu0 0.0
  %104 = vmatprep.subr.mxu0 0.0
  %105 = vmatpush1.msra.mxu0 0.0
  %106 = vmatprep.subr.mxu0 0.0
  %107 = vmatpush1.msra.mxu0 0.0
  %108 = vmatprep.subr.mxu0 0.0
  %109 = vmatpush1.msra.mxu0 0.0
  %110 = vmatprep.subr.mxu0 0.0
  %111 = vmatpush1.msra.mxu0 0.0
  %112 = vmatprep.subr.mxu0 0.0
  %113 = vmatpush1.msra.mxu0 0.0
  %114 = vmatprep.subr.mxu0 0.0
  %115 = vmatpush1.msra.mxu0 0.0
  %116 = vmatprep.subr.mxu0 0.0
  %117 = vmatpush1.msra.mxu0 0.0
  %118 = vmatprep.subr.mxu0 0.0
  %119 = vmatpush1.msra.mxu0 0.0
  %120 = vmatprep.subr.mxu0 0.0
  %121 = vmatpush1.msra.mxu0 0.0
  %122 = vmatprep.subr.mxu0 0.0
  %123 = vmatpush1.msra.mxu0 0.0
  %124 = vmatprep.subr.mxu0 0.0
  %125 = vmatpush1.msra.mxu0 0.0
  %126 = vmatprep.subr.mxu0 0.0
  %127 = vmatpush1.msra.mxu0 0.0
  %128 = vmatprep.subr.mxu0 0.0
  %129 = vmatpush1.msra.mxu0 0.0
  %130 = vmatprep.subr.mxu0 0.0
  %131 = vmatpush1.msra.mxu0 0.0
  %132 = vmatprep.subr.mxu0 0.0
  %133 = vmatpush1.msra.mxu0 0.0
  %134 = vmatprep.subr.mxu0 0.0
  %135 = vmatpush1.msra.mxu0 0.0
  %136 = vmatprep.subr.mxu0 0.0
  %137 = vmatpush1.msra.mxu0 0.0
  %138 = vmatprep.subr.mxu0 0.0
  %139 = vmatpush1.msra.mxu0 0.0
  %140 = vmatprep.subr.mxu0 0.0
  %141 = vmatpush1.msra.mxu0 0.0
  %142 = vmatprep.subr.mxu0 0.0
  %143 = vmatpush1.msra.mxu0 0.0
  %144 = vmatprep.subr.mxu0 0.0
  %145 = vmatpush1.msra.mxu0 0.0
  %146 = vmatprep.subr.mxu0 0.0
  %147 = vmatpush1.msra.mxu0 0.0
  %148 = vmatprep.subr.mxu0 0.0
  %149 = vmatpush1.msra.mxu0 0.0
  %150 = vmatprep.subr.mxu0 0.0
  %151 = vmatpush1.msra.mxu0 0.0
  %152 = vmatprep.subr.mxu0 0.0
  %153 = vmatpush1.msra.mxu0 0.0
  %154 = vmatprep.mubr.f32.mxu0 0.0
  %155 = vmatmul.mubr.f32.gmra.mrb[0].mxu0 %v43
  %v156 = vpop.f32.mrb[0].mxu0
  %v157 = vadd.f32 %v39, %v156
  %v158 = vpop.f32.mrb[0].mxu0
  %159 = vmatprep.mubr.f32.mxu0 0.0
  %160 = vmatmul.mubr.f32.gmra.mrb[0].mxu0 %v46
  %v161 = vpop.f32.mrb[0].mxu0
  %v162 = vadd.f32 %v39, %v161
  %v163 = vpop.f32.mrb[0].mxu0
  %164 = vmatprep.mubr.f32.mxu0 0.0
  %165 = vmatmul.mubr.f32.gmra.mrb[0].mxu0 %v49
  %v166 = vpop.f32.mrb[0].mxu0
  %v167 = vadd.f32 %v39, %v166
  %v168 = vpop.f32.mrb[0].mxu0
  %169 = vmatprep.mubr.f32.mxu0 0.0
  %170 = vmatmul.mubr.f32.gmra.mrb[0].mxu0 %v52
  %v171 = vpop.f32.mrb[0].mxu0
  %v172 = vadd.f32 %v39, %v171
  %v173 = vpop.f32.mrb[0].mxu0
  %174 = vmatprep.mubr.f32.mxu0 0.0
  %175 = vmatmul.mubr.f32.gmra.mrb[0].mxu0 %v55
  %v176 = vpop.f32.mrb[0].mxu0
  %v177 = vadd.f32 %v39, %v176
  %v178 = vpop.f32.mrb[0].mxu0
  %179 = vmatprep.mubr.f32.mxu0 0.0
  %180 = vmatmul.mubr.f32.gmra.mrb[0].mxu0 %v58
  %v181 = vpop.f32.mrb[0].mxu0
  %v182 = vadd.f32 %v39, %v181
  %v183 = vpop.f32.mrb[0].mxu0
  %184 = vmatprep.mubr.f32.mxu0 0.0
  %185 = vmatmul.mubr.f32.gmra.mrb[0].mxu0 %v61
  %v186 = vpop.f32.mrb[0].mxu0
  %v187 = vadd.f32 %v39, %v186
  %v188 = vpop.f32.mrb[0].mxu0
  %189 = vmatprep.mubr.f32.mxu0 0.0
  %190 = vmatmul.mubr.f32.gmra.mrb[0].mxu0 %v64
  %v191 = vpop.f32.mrb[0].mxu0
  %v192 = vadd.f32 %v39, %v191
  %v193 = vpop.f32.mrb[0].mxu0
  %194 = vmatprep.mubr.f32.mxu0 0.0
  %195 = vmatmul.mubr.f32.gmra.mrb[0].mxu0 %v67
  %v196 = vpop.f32.mrb[0].mxu0
  %v197 = vadd.f32 %v39, %v196
  %v198 = vpop.f32.mrb[0].mxu0
  %199 = vmatprep.mubr.f32.mxu0 0.0
  %200 = vmatmul.mubr.f32.gmra.mrb[0].mxu0 %v70
  %v201 = vpop.f32.mrb[0].mxu0
  %v202 = vadd.f32 %v39, %v201
  %v203 = vpop.f32.mrb[0].mxu0
  %204 = vmatprep.mubr.f32.mxu0 0.0
  %205 = vmatmul.mubr.f32.gmra.mrb[0].mxu0 %v73
  %v206 = vpop.f32.mrb[0].mxu0
  %v207 = vadd.f32 %v39, %v206
  %v208 = vpop.f32.mrb[0].mxu0
  %209 = vmatprep.mubr.f32.mxu0 0.0
  %210 = vmatmul.mubr.f32.gmra.mrb[0].mxu0 %v76
  %v211 = vpop.f32.mrb[0].mxu0
  %v212 = vadd.f32 %v39, %v211
  %v213 = vpop.f32.mrb[0].mxu0
  %214 = vmatprep.mubr.f32.mxu0 0.0
  %215 = vmatmul.mubr.f32.gmra.mrb[0].mxu0 %v79
  %v216 = vpop.f32.mrb[0].mxu0
  %v217 = vadd.f32 %v39, %v216
  %v218 = vpop.f32.mrb[0].mxu0
  %219 = vmatprep.mubr.f32.mxu0 0.0
  %220 = vmatmul.mubr.f32.gmra.mrb[0].mxu0 %v82
  %v221 = vpop.f32.mrb[0].mxu0
  %v222 = vadd.f32 %v39, %v221
  %v223 = vpop.f32.mrb[0].mxu0
  %224 = vmatprep.mubr.f32.mxu0 0.0
  %225 = vmatmul.mubr.f32.gmra.mrb[0].mxu0 %v85
  %v226 = vpop.f32.mrb[0].mxu0
  %v227 = vadd.f32 %v39, %v226
  %v228 = vpop.f32.mrb[0].mxu0
  %229 = vmatprep.mubr.f32.mxu0 0.0
  %230 = vmatmul.mubr.f32.gmra.mrb[0].mxu0 %v88
  %v231 = vpop.f32.mrb[0].mxu0
  %v232 = vadd.f32 %v39, %v231
  %v233 = vpop.f32.mrb[0].mxu0
  %234 = vdwg.mxu0
  %235 = vst [vmem:[%s3] sm:$0xff] %v157
  %236 = vst [vmem:[%s3 + $0x8] sm:$0xff] %v162
  %237 = vst [vmem:[%s3 + $0x10] sm:$0xff] %v167
  %238 = vst [vmem:[%s3 + $0x18] sm:$0xff] %v172
  %239 = vst [vmem:[%s3 + $0x20] sm:$0xff] %v177
  %240 = vst [vmem:[%s3 + $0x28] sm:$0xff] %v182
  %241 = vst [vmem:[%s3 + $0x30] sm:$0xff] %v187
  %242 = vst [vmem:[%s3 + $0x38] sm:$0xff] %v192
  %243 = vst [vmem:[%s3 + $0x40] sm:$0xff] %v197
  %244 = vst [vmem:[%s3 + $0x48] sm:$0xff] %v202
  %245 = vst [vmem:[%s3 + $0x50] sm:$0xff] %v207
  %246 = vst [vmem:[%s3 + $0x58] sm:$0xff] %v212
  %247 = vst [vmem:[%s3 + $0x60] sm:$0xff] %v217
  %248 = vst [vmem:[%s3 + $0x68] sm:$0xff] %v222
  %249 = vst [vmem:[%s3 + $0x70] sm:$0xff] %v227
  %250 = vst [vmem:[%s3 + $0x78] sm:$0xff] %v232
  // Predicated region
  $region14: #{_lambda_.1} parent=0 // pred_check
    _
  $region15: #{_lambda_.1} parent=0 // pred_check_branch
    %252 = sbr.rel (0) target = $region17
  $region16: #{_lambda_.1} parent=0 // pred_region
    _
  $region17: #{_lambda_.1} parent=0 // pred_fallthru
    _
  // Predicated region
  $region18: #{_lambda_.1} parent=0 // pred_check
    _
  $region19: #{_lambda_.1} parent=0 // pred_check_branch
    %254 = sbr.rel (0) target = $region21
  $region20: #{_lambda_.1} parent=0 // pred_region
    _
  $region21: #{_lambda_.1} parent=0 // pred_fallthru
    _

</llo_original>
